<compile_context>
chip_gen: v6e
topology: v6e:2x2x1
jax: 0.10.0
libtpu: 0.0.40
codegen_flags: <defaults>
</compile_context>

<pallas_src>
import jax
import jax.numpy as jnp
from jax.experimental import pallas as pl
from jax.experimental.pallas import tpu as pltpu


def _aconc_kernel(x_ref, params_ref, o_ref):
    # x_ref:      (rb, cb)  input tile
    # params_ref: (rb, 3)   f32 per-row params: [d = p1-p2, p2, beta]
    # o_ref:      (rb, cb)  output tile
    x = x_ref[...].astype(jnp.float32)
    d = params_ref[:, 0:1]
    p2 = params_ref[:, 1:2]
    beta = params_ref[:, 2:3]

    dpx = d * x                               # (rb,1) * (rb,cb) broadcast
    z = beta * dpx
    sig = 0.5 * jnp.tanh(0.5 * z) + 0.5       # sigmoid on the EUP (no VPU div)
    o_ref[...] = (dpx * sig + p2 * x).astype(o_ref.dtype)


def _choose_tiles(rows, hw, itemsize):
    """Pick (row_block, col_block): ~2 MiB per x tile, lane-dense, sublane-aligned."""
    sub = 8 if itemsize >= 4 else 16           # sublane packing: f32 vs bf16/f16
    target_bytes = 2 * 1024 * 1024             # ~2 MiB/tile (safe within v7x 64 MiB VMEM)

    # Lane (last-dim) tile: multiple of 128 (unmasked stores) or the full extent.
    if hw % 128 == 0 and hw > 2048:
        cb = 2048
    else:
        cb = hw

    # Row tile: multiple of the sublane count, sized to hit the byte target.
    rb = target_bytes // max(1, cb * itemsize)
    if rb >= rows:
        rb = rows
    else:
        rb = max(sub, (rb // sub) * sub)
        if rb >= rows:
            rb = rows
    return rb, cb


def aconc_forward(x_nchw, p1, p2, beta, *, row_block=None, col_block=None):
    """x_nchw: (N, C, H, W); p1/p2/beta: (1, C, 1, 1) — PyTorch conventions."""
    N, C, H, W = x_nchw.shape
    rows, hw = N * C, H * W
    itemsize = x_nchw.dtype.itemsize
    sub = 8 if itemsize >= 4 else 16

    x2d = x_nchw.reshape(rows, hw)

    # One resident per-row param slab: columns = [p1-p2, p2, beta], always f32.
    d_c = (p1 - p2).reshape(C).astype(jnp.float32)
    p2_c = p2.reshape(C).astype(jnp.float32)
    b_c = beta.reshape(C).astype(jnp.float32)
    params = jnp.tile(jnp.stack([d_c, p2_c, b_c], axis=-1), (N, 1))   # (rows, 3)

    rb_auto, cb_auto = _choose_tiles(rows, hw, itemsize)
    rb = row_block if row_block is not None else rb_auto
    cb = col_block if col_block is not None else cb_auto

    # (sublane, lane) tiling constraints.
    assert rb == rows or rb % sub == 0, f"row_block {rb} must be {sub}-aligned or == rows"
    assert cb == hw or cb % 128 == 0, f"col_block {cb} must be 128-aligned or == H*W"

    grid = (pl.cdiv(rows, rb), pl.cdiv(hw, cb))

    n_elem = rows * hw
    cost = pl.CostEstimate(
        flops=5 * n_elem,
        transcendentals=n_elem,
        bytes_accessed=2 * n_elem * itemsize + rows * 3 * 4,
    )

    out2d = pl.pallas_call(
        _aconc_kernel,
        out_shape=jax.ShapeDtypeStruct((rows, hw), x_nchw.dtype),
        grid_spec=pltpu.PrefetchScalarGridSpec(
            num_scalar_prefetch=0,
            grid=grid,
            in_specs=[
                pl.BlockSpec((rb, cb), lambda i, j: (i, j)),
                # Param slab: same block for every lane step -> no re-DMA.
                pl.BlockSpec((rb, 3), lambda i, j: (i, 0)),
            ],
            out_specs=pl.BlockSpec((rb, cb), lambda i, j: (i, j)),
        ),
        compiler_params=pltpu.CompilerParams(
            dimension_semantics=("parallel", "parallel"),
            vmem_limit_bytes=32 * 1024 * 1024,
        ),
        cost_estimate=cost,
    )(x2d, params)

    return out2d.reshape(N, C, H, W)


def aconc_reference(x, p1, p2, beta):
    dpx = (p1 - p2) * x
    return dpx * jax.nn.sigmoid(beta * dpx) + p2 * x


if __name__ == "__main__":
    key = jax.random.PRNGKey(0)
    k_x, k_p1, k_p2, k_x2, k_p1b, k_p2b = jax.random.split(key, 6)

    # --- Small shape matching the PyTorch module defaults ---
    N, C, H, W = 2, 4, 16, 16
    x = jax.random.normal(k_x, (N, C, H, W), dtype=jnp.float32)
    p1 = jax.random.normal(k_p1, (1, C, 1, 1), dtype=jnp.float32)
    p2 = jax.random.normal(k_p2, (1, C, 1, 1), dtype=jnp.float32)
    beta = jnp.ones((1, C, 1, 1), dtype=jnp.float32)

    out = jax.block_until_ready(aconc_forward(x, p1, p2, beta))
    ref = aconc_reference(x, p1, p2, beta)
    assert out.shape == (N, C, H, W)
    assert jnp.allclose(out, ref, atol=1e-5, rtol=1e-5), "mismatch vs reference (small)"

    # --- Slightly larger shape with an explicit multi-step grid (exercises
    #     2-D tiling + resident param slab across lane steps) ---
    N2, C2, H2, W2 = 2, 16, 32, 32
    x2 = jax.random.normal(k_x2, (N2, C2, H2, W2), dtype=jnp.float32)
    p1b = jax.random.normal(k_p1b, (1, C2, 1, 1), dtype=jnp.float32)
    p2b = jax.random.normal(k_p2b, (1, C2, 1, 1), dtype=jnp.float32)
    betab = jnp.ones((1, C2, 1, 1), dtype=jnp.float32)

    out2 = jax.block_until_ready(
        aconc_forward(x2, p1b, p2b, betab, row_block=8, col_block=128))
    ref2 = aconc_reference(x2, p1b, p2b, betab)
    assert jnp.allclose(out2, ref2, atol=1e-5, rtol=1e-5), "mismatch vs reference (tiled)"

    print("KERNEL_OK")
</pallas_src>

<mosaic_0001>
module attributes {stable_mosaic.version = 11 : i64} {
  func.func @_aconc_kernel(%arg0: i32, %arg1: i32, %arg2: memref<8x256xf32, #tpu.memory_space<vmem>>, %arg3: memref<8x3xf32, #tpu.memory_space<vmem>>, %arg4: memref<8x256xf32, #tpu.memory_space<vmem>>) attributes {dimension_semantics = [#tpu.dimension_semantics<parallel>, #tpu.dimension_semantics<parallel>], iteration_bounds = array<i64: 1, 1>, scalar_prefetch = 0 : i64, scratch_operands = 0 : i64, tpu.core_type = #tpu.core_type<tc>, window_params = [{transform_indices = @transform_0, window_bounds = array<i64: 8, 256>}, {transform_indices = @transform_1, window_bounds = array<i64: 8, 3>}, {transform_indices = @transform_2, window_bounds = array<i64: 8, 256>}]} {
    %c0 = arith.constant 0 : index
    %c0_0 = arith.constant 0 : index
    %0 = vector.load %arg2[%c0, %c0_0] : memref<8x256xf32, #tpu.memory_space<vmem>>, vector<8x256xf32>
    %c0_1 = arith.constant 0 : index
    %c0_2 = arith.constant 0 : index
    %1 = vector.load %arg3[%c0_1, %c0_2] : memref<8x3xf32, #tpu.memory_space<vmem>>, vector<8x1xf32>
    %c0_3 = arith.constant 0 : index
    %c1 = arith.constant 1 : index
    %2 = vector.load %arg3[%c0_3, %c1] : memref<8x3xf32, #tpu.memory_space<vmem>>, vector<8x1xf32>
    %c0_4 = arith.constant 0 : index
    %c2 = arith.constant 2 : index
    %3 = vector.load %arg3[%c0_4, %c2] : memref<8x3xf32, #tpu.memory_space<vmem>>, vector<8x1xf32>
    %4 = vector.broadcast %1 : vector<8x1xf32> to vector<8x256xf32>
    %5 = arith.mulf %4, %0 : vector<8x256xf32>
    %6 = vector.broadcast %3 : vector<8x1xf32> to vector<8x256xf32>
    %7 = arith.mulf %6, %5 : vector<8x256xf32>
    %cst = arith.constant 5.000000e-01 : f32
    %8 = vector.broadcast %cst : f32 to vector<8x256xf32>
    %9 = arith.mulf %8, %7 : vector<8x256xf32>
    %10 = math.tanh %9 : vector<8x256xf32>
    %cst_5 = arith.constant 5.000000e-01 : f32
    %11 = vector.broadcast %cst_5 : f32 to vector<8x256xf32>
    %12 = arith.mulf %11, %10 : vector<8x256xf32>
    %cst_6 = arith.constant 5.000000e-01 : f32
    %13 = vector.broadcast %cst_6 : f32 to vector<8x256xf32>
    %14 = arith.addf %12, %13 : vector<8x256xf32>
    %15 = arith.mulf %5, %14 : vector<8x256xf32>
    %16 = vector.broadcast %2 : vector<8x1xf32> to vector<8x256xf32>
    %17 = arith.mulf %16, %0 : vector<8x256xf32>
    %18 = arith.addf %15, %17 : vector<8x256xf32>
    %c0_7 = arith.constant 0 : index
    %c0_8 = arith.constant 0 : index
    %19 = vector.load %arg4[%c0_7, %c0_8] : memref<8x256xf32, #tpu.memory_space<vmem>>, vector<8x256xf32>
    tpu.vector_store %arg4[%c0_7, %c0_8], %18 {strides = array<i32>} : memref<8x256xf32, #tpu.memory_space<vmem>>, vector<8x256xf32>,
    return
  }
  func.func @transform_0(%arg0: i32, %arg1: i32) -> (i32, i32) {
    %c0_i32 = arith.constant 0 : i32
    return %arg0, %arg1 : i32, i32
  }
  func.func @transform_1(%arg0: i32, %arg1: i32) -> (i32, i32) {
    %c0_i32 = arith.constant 0 : i32
    %c0_i32_0 = arith.constant 0 : i32
    return %arg0, %c0_i32 : i32, i32
  }
  func.func @transform_2(%arg0: i32, %arg1: i32) -> (i32, i32) {
    %c0_i32 = arith.constant 0 : i32
    return %arg0, %arg1 : i32, i32
  }
}

</mosaic_0001>

<llo_original>
// kernel: tpu_custom_call.1
$region0: #{tpu_custom_call.1}
  #allocation0 [shape = 'u32[]', space=smem, size = 0x4, offset = 0x4, fixed_abs, tag = 'smem constant byte address 0x4 - core index']
  #allocation1 [shape = 'u32[144,128]{1,0:T(1,128)}', space=vmem, size = 0x12000, scoped, tag = 'internal scratch']
  %s0 = inlined_call_operand.hbm [shape: f32[8,256], index: 0, kind: input, shape index: {}]
  %s1 = inlined_call_operand.vmem [shape: f32[8,3], index: 1, kind: input, shape index: {}]
  %s2 = inlined_call_operand.hbm [shape: f32[8,256], index: 2, kind: output, shape index: {}]
  %s3 = sld [smem:[#allocation0]]
  $region22: #{tpu_custom_call.1} parent=0
    _
  %s5 = ssub.s32 1, %s3
  %s6 = scalar_select 0, %s5, %s3
  $region1: #{tpu_custom_call.1} parent=0
    #allocation2 [shape = 'u8[8192]{0}', space=vmem, size = 0x2000, scoped, tag = 'input window, operand 0, single buffered']
    #allocation3 [shape = 's32[1]{0}', space=sflag, size = 0x4, scoped, tag = 'scoped memory for tpu_custom_call.1']
    #allocation4 [shape = 's32[1]{0}', space=sflag, size = 0x4, scoped, tag = 'scoped memory for tpu_custom_call.1']
    #allocation5 [shape = 'u8[8192]{0}', space=vmem, size = 0x2000, scoped, tag = 'output window, operand 0, single buffered']
    %7 = vsyncpa [#allocation3], 0
    %8 = vsyncpa [#allocation4], 0
    // Predicated region
    $region2: #{tpu_custom_call.1} parent=1 // pred_check
      _
    $region3: #{tpu_custom_call.1} parent=1 // pred_check_branch
      %10 = sbr.rel (0) target = $region5
    $region4: #{tpu_custom_call.1} parent=1 // pred_region
      %s12 = ssub.s32 256, 256
      %13 = vsyncadd [#allocation3], %s12
      %s15 = sshll.u32 [#allocation2], 4
      %s16 = int_to_ptr.vmem [resolvable:$true] %s15
      %18 = dma.hbm_to_vmem [thread:$0]  %s0, 256, %s16, [#allocation3]
    $region5: #{tpu_custom_call.1} parent=1 // pred_fallthru
      _
    // Predicated region
    $region6: #{tpu_custom_call.1} parent=1 // pred_check
      _
    $region7: #{tpu_custom_call.1} parent=1 // pred_check_branch
      %20 = sbr.rel (0) target = $region9
    $region8: #{tpu_custom_call.1} parent=1 // pred_region
      _
    $region9: #{tpu_custom_call.1} parent=1 // pred_fallthru
      _
    // Predicated region
    $region10: #{tpu_custom_call.1} parent=1 // pred_check
      _
    $region11: #{tpu_custom_call.1} parent=1 // pred_check_branch
      %22 = sbr.rel (0) target = $region13
    $region12: #{tpu_custom_call.1} parent=1 // pred_region
      %23 = dma.done [#allocation3], 256
    $region13: #{tpu_custom_call.1} parent=1 // pred_fallthru
      _
    %v24 = vld [vmem:[#allocation2] sm:$0xff]
    %v25 = vld [vmem:[#allocation2 + $0x8] sm:$0xff]
    %v26 = vld [vmem:[%s1] sm:$0xff]
    %28 = vset.pattern.permute.xlu0 0
    %29 = vperm.xlu0 %28, %v26
    %v30 = vpop.permute.xlu0 %29
    %v32 = vmul.f32 %v30, %v24
    %v33 = vmul.f32 %v30, %v25
    %34 = vset.pattern.permute.xlu0 2
    %35 = vperm.xlu0 %34, %v26
    %v36 = vpop.permute.xlu0 %35
    %v38 = vmul.f32 %v36, %v32
    %v39 = vmul.f32 %v36, %v33
    %v40 = vmul.f32 %v38, 0.5
    %v41 = vmul.f32 %v39, 0.5
    %v42 = vtanh.pop %v40
    %v43 = vtanh.pop %v41
    %v44 = vmul.f32 %v42, 0.5
    %v45 = vmul.f32 %v43, 0.5
    %v46 = vadd.f32 %v44, 0.5
    %v47 = vadd.f32 %v45, 0.5
    %v48 = vmul.f32 %v32, %v46
    %v49 = vmul.f32 %v33, %v47
    %50 = vset.pattern.permute.xlu0 1
    %51 = vperm.xlu0 %50, %v26
    %v52 = vpop.permute.xlu0 %51
    %v54 = vmul.f32 %v52, %v24
    %v55 = vmul.f32 %v52, %v25
    %v56 = vadd.f32 %v48, %v54
    %v57 = vadd.f32 %v49, %v55
    %58 = vst [vmem:[#allocation5] sm:$0xff] %v56
    %59 = vst [vmem:[#allocation5 + $0x8] sm:$0xff] %v57
    // Predicated region
    $region14: #{tpu_custom_call.1} parent=1 // pred_check
      _
    $region15: #{tpu_custom_call.1} parent=1 // pred_check_branch
      %61 = sbr.rel (0) target = $region17
    $region16: #{tpu_custom_call.1} parent=1 // pred_region
      %s63 = ssub.s32 256, 256
      %64 = vsyncadd [#allocation4], %s63
      %s66 = sshll.u32 [#allocation5], 4
      %s67 = int_to_ptr.vmem [resolvable:$true] %s66
      %69 = dma.vmem_to_hbm [thread:$0]  %s67, 256, %s2, [#allocation4]
    $region17: #{tpu_custom_call.1} parent=1 // pred_fallthru
      _
    // Predicated region
    $region18: #{tpu_custom_call.1} parent=1 // pred_check
      _
    $region19: #{tpu_custom_call.1} parent=1 // pred_check_branch
      %71 = sbr.rel (0) target = $region21
    $region20: #{tpu_custom_call.1} parent=1 // pred_region
      %72 = dma.done [#allocation4], 256
    $region21: #{tpu_custom_call.1} parent=1 // pred_fallthru
      _
    %73 = vsyncpa [#allocation3], 1
    %74 = vsyncpa [#allocation4], 1

</llo_original>
